<compile_context>
chip_gen: v7x
topology: tpu7x:2x2x1
jax: 0.10.0
libtpu: 0.0.40
codegen_flags: <defaults>
</compile_context>

<pallas_src>
import functools

import jax
import jax.numpy as jnp
from jax.experimental import pallas as pl
from jax.experimental.pallas import tpu as pltpu


def hierarchy_loss_kernel(preds_ref, labels_ref, w_ref, r_ref, out_ref, acc_ref):
    step = pl.program_id(0)

    @pl.when(step == 0)
    def _():
        acc_ref[...] = jnp.zeros_like(acc_ref)

    bt = preds_ref.shape[0]
    c = r_ref.shape[0]

    preds = preds_ref[...]     # [bt, 1] int32
    labels = labels_ref[...]   # [bt, 1] int32
    w = w_ref[...]             # [bt, 1] f32 (1/B for valid rows, 0 for padding)

    class_iota = jax.lax.broadcasted_iota(jnp.int32, (bt, c), 1)
    onehot_pred = (class_iota == preds).astype(jnp.float32)     # [bt, c]
    onehot_label = (class_iota == labels).astype(jnp.float32)   # [bt, c]

    # Row gather R[preds, :] on the MXU, then pick the label column via a
    # masked lane reduce.  R holds real coverage ratios (not indices); keep
    # the matmul at HIGHEST precision so values match the f32 reference.
    rows = jnp.dot(onehot_pred, r_ref[...],
                   precision=jax.lax.Precision.HIGHEST,
                   preferred_element_type=jnp.float32)          # [bt, c]
    rel_cov = jnp.sum(rows * onehot_label, axis=1, keepdims=True)   # [bt, 1]

    # Weighted partial sum of (1 - rel_cov); weights already carry the 1/B.
    acc_ref[...] += jnp.sum(w * (1.0 - rel_cov), axis=(0, 1), keepdims=True)

    @pl.when(step == pl.num_programs(0) - 1)
    def _():
        out_ref[...] = acc_ref[...]


@functools.partial(jax.jit, static_argnames=("b_tile",))
def hierarchy_loss(preds, labels, lcas, coverage_vec, *, b_tile=8):
    """preds, labels: int [B]; lcas: int [C, C]; coverage_vec: float [N, 1]."""
    B = preds.shape[0]
    C = lcas.shape[0]

    cov = coverage_vec.astype(jnp.float32).reshape(-1)            # [N]
    lcas_i = lcas.astype(jnp.int32)

    # Fused relative-coverage table (one-time XLA gather outside the kernel):
    #   R[i, j] = where(cov[i] != 0, cov[lcas[i, j]] / cov[i], 1)
    pred_cov = cov[:C][:, None]                                   # [C, 1]
    lca_cov = cov[lcas_i]                                         # [C, C]
    R = jnp.where(pred_cov != 0.0, lca_cov / pred_cov,
                  jnp.ones_like(lca_cov)).astype(jnp.float32)     # [C, C]

    # Pad the batch to a multiple of the tile; padded rows get weight 0.
    b_pad = pl.cdiv(B, b_tile) * b_tile
    pad = b_pad - B
    preds2 = jnp.pad(preds.astype(jnp.int32), (0, pad)).reshape(b_pad, 1)
    labels2 = jnp.pad(labels.astype(jnp.int32), (0, pad)).reshape(b_pad, 1)
    w = jnp.pad(jnp.full((B,), 1.0 / B, dtype=jnp.float32),
                (0, pad)).reshape(b_pad, 1)

    # TODO(synk): for very large C, swap the resident [C, C] R table for an
    # HBM (memory_space=pl.ANY) scalar-prefetch per-row gather keyed on preds.
    out = pl.pallas_call(
        hierarchy_loss_kernel,
        out_shape=jax.ShapeDtypeStruct((1, 1), jnp.float32),
        grid_spec=pltpu.PrefetchScalarGridSpec(
            num_scalar_prefetch=0,
            grid=(b_pad // b_tile,),
            in_specs=[
                pl.BlockSpec((b_tile, 1), lambda i: (i, 0)),   # preds tile
                pl.BlockSpec((b_tile, 1), lambda i: (i, 0)),   # labels tile
                pl.BlockSpec((b_tile, 1), lambda i: (i, 0)),   # per-sample weights
                pl.BlockSpec((C, C), lambda i: (0, 0)),        # resident R table
            ],
            out_specs=pl.BlockSpec((1, 1), lambda i: (0, 0)),
            scratch_shapes=[pltpu.VMEM((1, 1), jnp.float32)],
        ),
        compiler_params=pltpu.CompilerParams(
            dimension_semantics=("arbitrary",)),
    )(preds2, labels2, w, R)
    return out[0, 0]


def reference_loss(preds, labels, lcas, coverage_vec):
    lca = lcas[preds, labels.astype(jnp.int32)].astype(jnp.int32)
    lca_cov = coverage_vec[lca, 0]
    pred_cov = coverage_vec[preds, 0]
    rel_cov = jnp.where(pred_cov != 0.0, lca_cov / pred_cov,
                        jnp.ones_like(pred_cov))
    return jnp.mean(1.0 - rel_cov)


if __name__ == "__main__":
    B = 20         # batch of samples (not a multiple of the tile -> exercises padding)
    C = 16         # number of leaf classes (rows/cols of lcas)
    N = 31         # total number of hierarchy nodes (coverage_vec length)

    key = jax.random.PRNGKey(0)
    k1, k2, k3, k4 = jax.random.split(key, 4)

    # Deterministic synthetic "hierarchy" tensors (shapes follow the module).
    preds = jax.random.randint(k1, (B,), 0, C, dtype=jnp.int32)
    labels = jax.random.randint(k2, (B,), 0, C, dtype=jnp.int32)
    lcas = jax.random.randint(k3, (C, C), 0, N, dtype=jnp.int32)
    coverage_vec = jax.random.uniform(k4, (N, 1), dtype=jnp.float32)
    # Make at least one leaf coverage entry zero to exercise the where() branch.
    coverage_vec = coverage_vec.at[3, 0].set(0.0)

    out = hierarchy_loss(preds, labels, lcas, coverage_vec)
    out = jax.block_until_ready(out)

    ref = reference_loss(preds, labels, lcas, coverage_vec)
    assert jnp.allclose(out, ref, atol=1e-5, rtol=1e-5), (out, ref)

    print("KERNEL_OK")
</pallas_src>

<mosaic_0001>
module attributes {stable_mosaic.version = 11 : i64} {
  func.func @hierarchy_loss_kernel(%arg0: i32, %arg1: memref<8x1xi32, #tpu.memory_space<vmem>>, %arg2: memref<8x1xi32, #tpu.memory_space<vmem>>, %arg3: memref<8x1xf32, #tpu.memory_space<vmem>>, %arg4: memref<16x16xf32, #tpu.memory_space<vmem>>, %arg5: memref<1x1xf32, #tpu.memory_space<vmem>>, %arg6: memref<1x1xf32, #tpu.memory_space<vmem>>) attributes {dimension_semantics = [#tpu.dimension_semantics<arbitrary>], iteration_bounds = array<i64: 3>, scalar_prefetch = 0 : i64, scratch_operands = 1 : i64, tpu.core_type = #tpu.core_type<tc>, window_params = [{transform_indices = @transform_0, window_bounds = array<i64: 8, 1>}, {transform_indices = @transform_1, window_bounds = array<i64: 8, 1>}, {transform_indices = @transform_2, window_bounds = array<i64: 8, 1>}, {pipeline_mode = #tpu.pipeline_mode<synchronous>, transform_indices = @transform_3, window_bounds = array<i64: 16, 16>}, {pipeline_mode = #tpu.pipeline_mode<synchronous>, transform_indices = @transform_4, window_bounds = array<i64: 1, 1>}]} {
    %c0_i32 = arith.constant 0 : i32
    %0 = arith.cmpi eq, %arg0, %c0_i32 : i32
    %1 = arith.extui %0 : i1 to i32
    %c0_i32_0 = arith.constant 0 : i32
    %2 = arith.cmpi ne, %1, %c0_i32_0 : i32
    scf.if %2 {
      %cst_16 = arith.constant 0.000000e+00 : f32
      %34 = vector.broadcast %cst_16 : f32 to vector<1x1xf32>
      %c0_17 = arith.constant 0 : index
      %c0_18 = arith.constant 0 : index
      %35 = vector.load %arg6[%c0_17, %c0_18] : memref<1x1xf32, #tpu.memory_space<vmem>>, vector<1x1xf32>
      tpu.vector_store %arg6[%c0_17, %c0_18], %34 {strides = array<i32>} : memref<1x1xf32, #tpu.memory_space<vmem>>, vector<1x1xf32>,
    } else {
    }
    %c0 = arith.constant 0 : index
    %c0_1 = arith.constant 0 : index
    %3 = vector.load %arg1[%c0, %c0_1] : memref<8x1xi32, #tpu.memory_space<vmem>>, vector<8x1xi32>
    %c0_2 = arith.constant 0 : index
    %c0_3 = arith.constant 0 : index
    %4 = vector.load %arg2[%c0_2, %c0_3] : memref<8x1xi32, #tpu.memory_space<vmem>>, vector<8x1xi32>
    %c0_4 = arith.constant 0 : index
    %c0_5 = arith.constant 0 : index
    %5 = vector.load %arg3[%c0_4, %c0_5] : memref<8x1xf32, #tpu.memory_space<vmem>>, vector<8x1xf32>
    %6 = tpu.iota {dimensions = array<i32: 1>} : vector<8x16xi32>
    %7 = vector.broadcast %3 : vector<8x1xi32> to vector<8x16xi32>
    %8 = arith.cmpi eq, %6, %7 : vector<8x16xi32>
    %9 = arith.extui %8 : vector<8x16xi1> to vector<8x16xi32>
    %10 = arith.sitofp %9 : vector<8x16xi32> to vector<8x16xf32>
    %11 = vector.broadcast %4 : vector<8x1xi32> to vector<8x16xi32>
    %12 = arith.cmpi eq, %6, %11 : vector<8x16xi32>
    %13 = arith.extui %12 : vector<8x16xi1> to vector<8x16xi32>
    %14 = arith.sitofp %13 : vector<8x16xi32> to vector<8x16xf32>
    %c0_6 = arith.constant 0 : index
    %c0_7 = arith.constant 0 : index
    %15 = vector.load %arg4[%c0_6, %c0_7] : memref<16x16xf32, #tpu.memory_space<vmem>>, vector<16x16xf32>
    %cst = arith.constant dense<0.000000e+00> : vector<8x16xf32>
    %16 = tpu.matmul %10, %15, %cst {dimension_numbers = #tpu.dot_dimension_numbers<[1], [0], [0], [1], [0, 0, 1, 1], [], []>, precision = #tpu.contract_precision<fp32>} : vector<8x16xf32>, vector<16x16xf32>, vector<8x16xf32> -> vector<8x16xf32>
    %17 = arith.mulf %16, %14 : vector<8x16xf32>
    %cst_8 = arith.constant dense<0.000000e+00> : vector<8xf32>
    %18 = vector.multi_reduction <add>, %17, %cst_8 [1] : vector<8x16xf32> to vector<8xf32>
    %19 = vector.shape_cast %18 : vector<8xf32> to vector<8x1xf32>
    %c0_9 = arith.constant 0 : index
    %c0_10 = arith.constant 0 : index
    %20 = vector.load %arg6[%c0_9, %c0_10] : memref<1x1xf32, #tpu.memory_space<vmem>>, vector<1x1xf32>
    %cst_11 = arith.constant 1.000000e+00 : f32
    %21 = vector.broadcast %cst_11 : f32 to vector<8x1xf32>
    %22 = arith.subf %21, %19 : vector<8x1xf32>
    %23 = arith.mulf %5, %22 : vector<8x1xf32>
    %24 = vector.shape_cast %23 : vector<8x1xf32> to vector<1x8x1xf32>
    %cst_12 = arith.constant dense<0.000000e+00> : vector<1xf32>
    %25 = vector.multi_reduction <add>, %24, %cst_12 [1, 2] : vector<1x8x1xf32> to vector<1xf32>
    %26 = vector.shape_cast %25 : vector<1xf32> to vector<1x1x1xf32>
    %27 = vector.extract %26[0, 0, 0] : f32 from vector<1x1x1xf32>
    %28 = vector.broadcast %27 : f32 to vector<1x1xf32>
    %29 = arith.addf %20, %28 : vector<1x1xf32>
    %c0_13 = arith.constant 0 : index
    %c0_14 = arith.constant 0 : index
    %30 = vector.load %arg6[%c0_13, %c0_14] : memref<1x1xf32, #tpu.memory_space<vmem>>, vector<1x1xf32>
    tpu.vector_store %arg6[%c0_13, %c0_14], %29 {strides = array<i32>} : memref<1x1xf32, #tpu.memory_space<vmem>>, vector<1x1xf32>,
    %c2_i32 = arith.constant 2 : i32
    %31 = arith.cmpi eq, %arg0, %c2_i32 : i32
    %32 = arith.extui %31 : i1 to i32
    %c0_i32_15 = arith.constant 0 : i32
    %33 = arith.cmpi ne, %32, %c0_i32_15 : i32
    scf.if %33 {
      %c0_16 = arith.constant 0 : index
      %c0_17 = arith.constant 0 : index
      %34 = vector.load %arg6[%c0_16, %c0_17] : memref<1x1xf32, #tpu.memory_space<vmem>>, vector<1x1xf32>
      %c0_18 = arith.constant 0 : index
      %c0_19 = arith.constant 0 : index
      %35 = vector.load %arg5[%c0_18, %c0_19] : memref<1x1xf32, #tpu.memory_space<vmem>>, vector<1x1xf32>
      tpu.vector_store %arg5[%c0_18, %c0_19], %34 {strides = array<i32>} : memref<1x1xf32, #tpu.memory_space<vmem>>, vector<1x1xf32>,
    } else {
    }
    return
  }
  func.func @transform_0(%arg0: i32) -> (i32, i32) {
    %c0_i32 = arith.constant 0 : i32
    %c0_i32_0 = arith.constant 0 : i32
    return %arg0, %c0_i32 : i32, i32
  }
  func.func @transform_1(%arg0: i32) -> (i32, i32) {
    %c0_i32 = arith.constant 0 : i32
    %c0_i32_0 = arith.constant 0 : i32
    return %arg0, %c0_i32 : i32, i32
  }
  func.func @transform_2(%arg0: i32) -> (i32, i32) {
    %c0_i32 = arith.constant 0 : i32
    %c0_i32_0 = arith.constant 0 : i32
    return %arg0, %c0_i32 : i32, i32
  }
  func.func @transform_3(%arg0: i32) -> (i32, i32) {
    %c0_i32 = arith.constant 0 : i32
    %c0_i32_0 = arith.constant 0 : i32
    %c0_i32_1 = arith.constant 0 : i32
    return %c0_i32, %c0_i32_0 : i32, i32
  }
  func.func @transform_4(%arg0: i32) -> (i32, i32) {
    %c0_i32 = arith.constant 0 : i32
    %c0_i32_0 = arith.constant 0 : i32
    %c0_i32_1 = arith.constant 0 : i32
    return %c0_i32, %c0_i32_0 : i32, i32
  }
}

</mosaic_0001>

<llo_original>
// kernel: hierarchy_loss.1
$region0: #{hierarchy_loss.1}
  #allocation0 [shape = 'u32[]', space=smem, size = 0x4, offset = 0x4, fixed_abs, tag = 'smem constant byte address 0x4 - core index']
  #allocation1 [shape = 'u32[144,128]{1,0:T(1,128)}', space=vmem, size = 0x12000, scoped, tag = 'internal scratch']
  #allocation2 [shape = 'f32[1,1]{1,0:T(1,128)}', space=vmem, size = 0x200, scoped, tag = 'scratch operand']
  %s0 = inlined_call_operand.vmem [shape: s32[24,1], index: 0, kind: input, shape index: {}]
  %s1 = inlined_call_operand.vmem [shape: s32[24,1], index: 1, kind: input, shape index: {}]
  %s2 = inlined_call_operand.vmem [shape: f32[24,1], index: 2, kind: input, shape index: {}]
  %s3 = inlined_call_operand.vmem [shape: f32[16,16], index: 3, kind: input, shape index: {}]
  %s4 = inlined_call_operand.hbm [shape: f32[1,1], index: 4, kind: output, shape index: {}]
  %s5 = sld [smem:[#allocation0]]
  $region57: #{hierarchy_loss.1} parent=0
    _
  %s7 = ssub.s32 1, %s5
  %s8 = scalar_select 0, %s7, %s5
  $region1: #{hierarchy_loss.1} parent=0
    #allocation3 [shape = 'u8[512]{0}', space=vmem, size = 0x400, scoped, tag = 'output window, operand 0, single buffered']
    #allocation4 [shape = 's32[2]{0}', space=sflag, size = 0x8, scoped, tag = 'scoped memory for hierarchy_loss.1']
    %9 = vsyncpa [#allocation4], 0
    loop: start=0, step=1, limit=5
    $region2: #{hierarchy_loss.1} parent=1 // loop_pre_header
      _
    $region3: #{hierarchy_loss.1} parent=1 // loop_header
      %s11 = sphi 0, %s15
      %p12 = scmp.ge.s32.totalorder %s11, 5
      %s21 = sphi 0, %s23
      %s24 = sphi 0, %s21
      %s25 = sphi 0, %s24
      %s41 = sphi 0, %s25
      %s47 = sphi 0, %s49
      %s50 = sphi 0, %s47
      %s51 = sphi 0, %s50
      %s67 = sphi 0, %s51
      %s73 = sphi 0, %s75
      %s76 = sphi 0, %s73
      %s77 = sphi 0, %s76
      %s93 = sphi 0, %s77
      %s97 = sphi 0, %s97
      %s99 = sphi 0, %s97
      %s100 = sphi 0, %s99
      %s114 = sphi 0, %s100
      %s118 = sphi 0, %s118
      %s120 = sphi 0, %s118
      %s121 = sphi 0, %s120
      %s135 = sphi 0, %s121
    $region4: #{hierarchy_loss.1} parent=1 // loop_header_branch
      %14 = sbr.rel (%p12) target = $region8
    $region5: #{hierarchy_loss.1} parent=1 // loop_body
      %s16 = ssub.s32 %s11, 1
      %s17 = ssub.s32 %s11, 2
      %s18 = sadd.s32 %s11, 1
      %s19 = ssub.s32 %s11, %s18
      %p20 = scmp.eq.s32.totalorder %s19, 0
      %s22 = sadd.s32 %s21, 1
      %s23 = scalar_select %p20, %s21, %s22
      %p26 = pneg %p20
      %p27 = scmp.eq.s32.totalorder %s11, 2
      %p28 = por %p26, %p27
      %p29 = scmp.ne.s32.totalorder %s21, %s24
      %p30 = scmp.eq.s32.totalorder %s11, 0
      %p31 = por %p29, %p30
      %p32 = scmp.ne.s32.totalorder %s21, %s24
      %p33 = scmp.eq.s32.totalorder %s16, 2
      %p34 = por %p32, %p33
      %p35 = scmp.ne.s32.totalorder %s24, %s25
      %p36 = scmp.eq.s32.totalorder %s16, 0
      %p37 = por %p35, %p36
      %p38 = scmp.ne.s32.totalorder %s24, %s25
      %p39 = scmp.eq.s32.totalorder %s17, 2
      %p40 = por %p38, %p39
      %p42 = scmp.ne.s32.totalorder %s25, %s41
      %p43 = scmp.eq.s32.totalorder %s17, 0
      %p44 = por %p42, %p43
      %s45 = ssub.s32 %s11, %s18
      %p46 = scmp.eq.s32.totalorder %s45, 0
      %s48 = sadd.s32 %s47, 1
      %s49 = scalar_select %p46, %s47, %s48
      %p52 = pneg %p46
      %p53 = scmp.eq.s32.totalorder %s11, 2
      %p54 = por %p52, %p53
      %p55 = scmp.ne.s32.totalorder %s47, %s50
      %p56 = scmp.eq.s32.totalorder %s11, 0
      %p57 = por %p55, %p56
      %p58 = scmp.ne.s32.totalorder %s47, %s50
      %p59 = scmp.eq.s32.totalorder %s16, 2
      %p60 = por %p58, %p59
      %p61 = scmp.ne.s32.totalorder %s50, %s51
      %p62 = scmp.eq.s32.totalorder %s16, 0
      %p63 = por %p61, %p62
      %p64 = scmp.ne.s32.totalorder %s50, %s51
      %p65 = scmp.eq.s32.totalorder %s17, 2
      %p66 = por %p64, %p65
      %p68 = scmp.ne.s32.totalorder %s51, %s67
      %p69 = scmp.eq.s32.totalorder %s17, 0
      %p70 = por %p68, %p69
      %s71 = ssub.s32 %s11, %s18
      %p72 = scmp.eq.s32.totalorder %s71, 0
      %s74 = sadd.s32 %s73, 1
      %s75 = scalar_select %p72, %s73, %s74
      %p78 = pneg %p72
      %p79 = scmp.eq.s32.totalorder %s11, 2
      %p80 = por %p78, %p79
      %p81 = scmp.ne.s32.totalorder %s73, %s76
      %p82 = scmp.eq.s32.totalorder %s11, 0
      %p83 = por %p81, %p82
      %p84 = scmp.ne.s32.totalorder %s73, %s76
      %p85 = scmp.eq.s32.totalorder %s16, 2
      %p86 = por %p84, %p85
      %p87 = scmp.ne.s32.totalorder %s76, %s77
      %p88 = scmp.eq.s32.totalorder %s16, 0
      %p89 = por %p87, %p88
      %p90 = scmp.ne.s32.totalorder %s76, %s77
      %p91 = scmp.eq.s32.totalorder %s17, 2
      %p92 = por %p90, %p91
      %p94 = scmp.ne.s32.totalorder %s77, %s93
      %p95 = scmp.eq.s32.totalorder %s17, 0
      %p96 = por %p94, %p95
      %s98 = sadd.s32 %s97, 1
      %p101 = scmp.eq.s32.totalorder %s11, 2
      %p102 = scmp.ne.s32.totalorder %s97, %s99
      %p103 = scmp.eq.s32.totalorder %s11, 0
      %p104 = por %p102, %p103
      %p105 = scmp.ne.s32.totalorder %s97, %s99
      %p106 = scmp.eq.s32.totalorder %s16, 2
      %p107 = por %p105, %p106
      %p108 = scmp.ne.s32.totalorder %s99, %s100
      %p109 = scmp.eq.s32.totalorder %s16, 0
      %p110 = por %p108, %p109
      %p111 = scmp.ne.s32.totalorder %s99, %s100
      %p112 = scmp.eq.s32.totalorder %s17, 2
      %p113 = por %p111, %p112
      %p115 = scmp.ne.s32.totalorder %s100, %s114
      %p116 = scmp.eq.s32.totalorder %s17, 0
      %p117 = por %p115, %p116
      %s119 = sadd.s32 %s118, 1
      %p122 = scmp.eq.s32.totalorder %s11, 2
      %p123 = scmp.ne.s32.totalorder %s118, %s120
      %p124 = scmp.eq.s32.totalorder %s11, 0
      %p125 = por %p123, %p124
      %p126 = scmp.ne.s32.totalorder %s118, %s120
      %p127 = scmp.eq.s32.totalorder %s16, 2
      %p128 = por %p126, %p127
      %p129 = scmp.ne.s32.totalorder %s120, %s121
      %p130 = scmp.eq.s32.totalorder %s16, 0
      %p131 = por %p129, %p130
      %p132 = scmp.ne.s32.totalorder %s120, %s121
      %p133 = scmp.eq.s32.totalorder %s17, 2
      %p134 = por %p132, %p133
      %p136 = scmp.ne.s32.totalorder %s121, %s135
      %p137 = scmp.eq.s32.totalorder %s17, 0
      %p138 = por %p136, %p137
      %p139 = scmp.le.s32.totalorder 1, %s11
      %p140 = scmp.lt.s32.totalorder %s11, 4
      %p141 = pnand %p139, %p140
      %p142 = pneg %p141
      // Predicated region
      $region9: #{hierarchy_loss.1} parent=5 // pred_check
        _
      $region10: #{hierarchy_loss.1} parent=5 // pred_check_branch
        %144 = sbr.rel (%p141) target = $region12
      $region11: #{hierarchy_loss.1} parent=5 // pred_region
        %s145 = ssub.s32 %s11, 1
        // Predicated region
        $region13: #{hierarchy_loss.1} parent=11 // pred_check
          %p146 = pneg %p110
        $region14: #{hierarchy_loss.1} parent=11 // pred_check_branch
          %148 = sbr.rel (%p146) target = $region16
        $region15: #{hierarchy_loss.1} parent=11 // pred_region
          _
        $region16: #{hierarchy_loss.1} parent=11 // pred_fallthru
          _
      $region12: #{hierarchy_loss.1} parent=5 // pred_fallthru
        _
      %p149 = scmp.lt.s32.totalorder %s11, 3
      // Predicated region
      $region17: #{hierarchy_loss.1} parent=5 // pred_check
        %p150 = pneg %p149
      $region18: #{hierarchy_loss.1} parent=5 // pred_check_branch
        %152 = sbr.rel (%p150) target = $region20
      $region19: #{hierarchy_loss.1} parent=5 // pred_region
        // Predicated region
        $region21: #{hierarchy_loss.1} parent=19 // pred_check
          %p153 = pneg %p31
        $region22: #{hierarchy_loss.1} parent=19 // pred_check_branch
          %155 = sbr.rel (%p153) target = $region24
        $region23: #{hierarchy_loss.1} parent=19 // pred_region
          %p156 = scmp.lt.s32.totalorder %s11, 2
          %s157 = scalar_select %p156, %s11, 2
          %s158 = smul.addr %s157, 8
          %s159 = scalar_lea.vmem %s0, %s158
        $region24: #{hierarchy_loss.1} parent=19 // pred_fallthru
          _
        // Predicated region
        $region25: #{hierarchy_loss.1} parent=19 // pred_check
          %p160 = pneg %p57
        $region26: #{hierarchy_loss.1} parent=19 // pred_check_branch
          %162 = sbr.rel (%p160) target = $region28
        $region27: #{hierarchy_loss.1} parent=19 // pred_region
          %p163 = scmp.lt.s32.totalorder %s11, 2
          %s164 = scalar_select %p163, %s11, 2
          %s165 = smul.addr %s164, 8
          %s166 = scalar_lea.vmem %s1, %s165
        $region28: #{hierarchy_loss.1} parent=19 // pred_fallthru
          _
        // Predicated region
        $region29: #{hierarchy_loss.1} parent=19 // pred_check
          %p167 = pneg %p83
        $region30: #{hierarchy_loss.1} parent=19 // pred_check_branch
          %169 = sbr.rel (%p167) target = $region32
        $region31: #{hierarchy_loss.1} parent=19 // pred_region
          %p170 = scmp.lt.s32.totalorder %s11, 2
          %s171 = scalar_select %p170, %s11, 2
          %s172 = smul.addr %s171, 8
          %s173 = scalar_lea.vmem %s2, %s172
        $region32: #{hierarchy_loss.1} parent=19 // pred_fallthru
          _
      $region20: #{hierarchy_loss.1} parent=5 // pred_fallthru
        _
      %p174 = scmp.le.s32.totalorder 1, %s11
      %p175 = scmp.lt.s32.totalorder %s11, 4
      %p176 = pnand %p174, %p175
      %p177 = pneg %p176
      // Predicated region
      $region33: #{hierarchy_loss.1} parent=5 // pred_check
        _
      $region34: #{hierarchy_loss.1} parent=5 // pred_check_branch
        %179 = sbr.rel (%p176) target = $region36
      $region35: #{hierarchy_loss.1} parent=5 // pred_region
        %s180 = ssub.s32 %s11, 1
        %p181 = scmp.lt.s32.totalorder %s16, 2
        %s182 = scalar_select %p181, %s16, 2
        %s183 = smul.addr %s182, 8
        %s184 = scalar_lea.vmem %s0, %s183
        %p185 = pneg %p37
        %p186 = pneg %p34
        %p187 = scmp.lt.s32.totalorder %s16, 2
        %s188 = scalar_select %p187, %s16, 2
        %s189 = smul.addr %s188, 8
        %s190 = scalar_lea.vmem %s1, %s189
        %p191 = pneg %p63
        %p192 = pneg %p60
        %p193 = scmp.lt.s32.totalorder %s16, 2
        %s194 = scalar_select %p193, %s16, 2
        %s195 = smul.addr %s194, 8
        %s196 = scalar_lea.vmem %s2, %s195
        %p197 = pneg %p89
        %p198 = pneg %p86
        %p199 = pneg %p110
        %p200 = pneg %p107
        %p201 = pneg %p131
        %p202 = pneg %p128
        %p203 = scmp.lt.s32.totalorder %s16, 2
        %s204 = scalar_select %p203, %s16, 2
        %s205 = smul.addr %s204, 8
        %s206 = scalar_lea.vmem %s0, %s205
        %p207 = scmp.lt.s32.totalorder %s16, 2
        %s208 = scalar_select %p207, %s16, 2
        %s209 = smul.addr %s208, 8
        %s210 = scalar_lea.vmem %s1, %s209
        %p211 = scmp.lt.s32.totalorder %s16, 2
        %s212 = scalar_select %p211, %s16, 2
        %s213 = smul.addr %s212, 8
        %s214 = scalar_lea.vmem %s2, %s213
        %p215 = scmp.eq.s32.totalorder %s16, 0
        // Predicated region
        $region37: #{hierarchy_loss.1} parent=35 // pred_check
          %p216 = pneg %p215
        $region38: #{hierarchy_loss.1} parent=35 // pred_check_branch
          %218 = sbr.rel (%p216) target = $region40
        $region39: #{hierarchy_loss.1} parent=35 // pred_region
          %vm219 = vcmask 0
          %220 = vst.msk [vmem:[#allocation2] sm:$0x1] %vm219, 0.0
        $region40: #{hierarchy_loss.1} parent=35 // pred_fallthru
          _
        %v221 = vld [vmem:[%s206] sm:$0xff]
        %v222 = vld [vmem:[%s210] sm:$0xff]
        %v223 = vld [vmem:[%s214] sm:$0xff]
        %v224 = vlaneseq
        %v225 = vand.u32 %v224, 127
        %226 = vset.pattern.permute.xlu0 0
        %227 = vperm.xlu0 %226, %v221
        %v228 = vpop.permute.xlu0 %227
        %vm229 = vcmp.eq.s32.totalorder %v225, %v228
        %v230 = vsel %vm229, 1, 0
        %v231 = vcvt.s32.f32 %v230
        %232 = vset.pattern.permute.xlu0 0
        %233 = vperm.xlu0 %232, %v222
        %v234 = vpop.permute.xlu0 %233
        %vm235 = vcmp.eq.s32.totalorder %v225, %v234
        %v236 = vsel %vm235, 1, 0
        %v237 = vcvt.s32.f32 %v236
        %v238 = vld [vmem:[%s3] sm:$0xff]
        %v239 = vld [vmem:[%s3 + $0x8] sm:$0xff]
        %vm240 = vcmask 130048
        %v242 = vsel %vm240, %v231, 0
        %244 = vmatprep.subr.mxu0 0.0
        %v245 = vand.u32 %v238, 4294901760
        %246 = vmatpush1.msra.mxu0 %v245
        %247 = vmatprep.subr.mxu0 0.0
        %v248 = vand.u32 %v239, 4294901760
        %249 = vmatpush1.msra.mxu0 %v248
        %250 = vmatprep.subr.mxu0 0.0
        %251 = vmatpush1.msra.mxu0 0.0
        %252 = vmatprep.subr.mxu0 0.0
        %253 = vmatpush1.msra.mxu0 0.0
        %254 = vmatprep.subr.mxu0 0.0
        %255 = vmatpush1.msra.mxu0 0.0
        %256 = vmatprep.subr.mxu0 0.0
        %257 = vmatpush1.msra.mxu0 0.0
        %258 = vmatprep.subr.mxu0 0.0
        %259 = vmatpush1.msra.mxu0 0.0
        %260 = vmatprep.subr.mxu0 0.0
        %261 = vmatpush1.msra.mxu0 0.0
        %262 = vmatprep.subr.mxu0 0.0
        %263 = vmatpush1.msra.mxu0 0.0
        %264 = vmatprep.subr.mxu0 0.0
        %265 = vmatpush1.msra.mxu0 0.0
        %266 = vmatprep.subr.mxu0 0.0
        %267 = vmatpush1.msra.mxu0 0.0
        %268 = vmatprep.subr.mxu0 0.0
        %269 = vmatpush1.msra.mxu0 0.0
        %270 = vmatprep.subr.mxu0 0.0
        %271 = vmatpush1.msra.mxu0 0.0
        %272 = vmatprep.subr.mxu0 0.0
        %273 = vmatpush1.msra.mxu0 0.0
        %274 = vmatprep.subr.mxu0 0.0
        %275 = vmatpush1.msra.mxu0 0.0
        %276 = vmatprep.subr.mxu0 0.0
        %277 = vmatpush1.msra.mxu0 0.0
        %278 = vmatprep.subr.mxu0 0.0
        %279 = vmatpush1.msra.mxu0 0.0
        %280 = vmatprep.subr.mxu0 0.0
        %281 = vmatpush1.msra.mxu0 0.0
        %282 = vmatprep.subr.mxu0 0.0
        %283 = vmatpush1.msra.mxu0 0.0
        %284 = vmatprep.subr.mxu0 0.0
        %285 = vmatpush1.msra.mxu0 0.0
        %286 = vmatprep.subr.mxu0 0.0
        %287 = vmatpush1.msra.mxu0 0.0
        %288 = vmatprep.subr.mxu0 0.0
        %289 = vmatpush1.msra.mxu0 0.0
        %290 = vmatprep.subr.mxu0 0.0
        %291 = vmatpush1.msra.mxu0 0.0
        %292 = vmatprep.subr.mxu0 0.0
        %293 = vmatpush1.msra.mxu0 0.0
        %294 = vmatprep.subr.mxu0 0.0
        %295 = vmatpush1.msra.mxu0 0.0
        %296 = vmatprep.subr.mxu0 0.0
        %297 = vmatpush1.msra.mxu0 0.0
        %298 = vmatprep.subr.mxu0 0.0
        %299 = vmatpush1.msra.mxu0 0.0
        %300 = vmatprep.subr.mxu0 0.0
        %301 = vmatpush1.msra.mxu0 0.0
        %302 = vmatprep.subr.mxu0 0.0
        %303 = vmatpush1.msra.mxu0 0.0
        %304 = vmatprep.subr.mxu0 0.0
        %305 = vmatpush1.msra.mxu0 0.0
        %306 = vmatprep.subr.mxu0 0.0
        %307 = vmatpush1.msra.mxu0 0.0
        %308 = vmatprep.subr.mxu0 0.0
        %309 = vmatpush1.msra.mxu0 0.0
        %310 = vmatprep.mubr.f32.mxu0 0.0
        %v311 = vand.u32 %v242, 4294901760
        %v312 = vsub.f32 %v242, %v311
        %v313 = vand.u32 %v312, 4294901760
        %v314 = vsub.f32 %v312, %v313
        %v315 = vand.u32 %v314, 4294901760
        %316 = vmatmul.mubr.f32.gmra.mrb[0].mxu0 %v315
        %v317 = vpop.f32.mrb[0].mxu0
        %v318 = vadd.f32 0.0, %v317
        %v319 = vpop.f32.mrb[0].mxu0
        %320 = vdwg.mxu0
        %321 = vmatprep.subr.mxu0 0.0
        %v322 = vand.u32 %v238, 4294901760
        %v323 = vsub.f32 %v238, %v322
        %v324 = vand.u32 %v323, 4294901760
        %v325 = vsub.f32 %v323, %v324
        %v326 = vand.u32 %v325, 4294901760
        %327 = vmatpush1.msra.mxu0 %v326
        %328 = vmatprep.subr.mxu0 0.0
        %v329 = vand.u32 %v239, 4294901760
        %v330 = vsub.f32 %v239, %v329
        %v331 = vand.u32 %v330, 4294901760
        %v332 = vsub.f32 %v330, %v331
        %v333 = vand.u32 %v332, 4294901760
        %334 = vmatpush1.msra.mxu0 %v333
        %335 = vmatprep.subr.mxu0 0.0
        %336 = vmatpush1.msra.mxu0 0.0
        %337 = vmatprep.subr.mxu0 0.0
        %338 = vmatpush1.msra.mxu0 0.0
        %339 = vmatprep.subr.mxu0 0.0
        %340 = vmatpush1.msra.mxu0 0.0
        %341 = vmatprep.subr.mxu0 0.0
        %342 = vmatpush1.msra.mxu0 0.0
        %343 = vmatprep.subr.mxu0 0.0
        %344 = vmatpush1.msra.mxu0 0.0
        %345 = vmatprep.subr.mxu0 0.0
        %346 = vmatpush1.msra.mxu0 0.0
        %347 = vmatprep.subr.mxu0 0.0
        %348 = vmatpush1.msra.mxu0 0.0
        %349 = vmatprep.subr.mxu0 0.0
        %350 = vmatpush1.msra.mxu0 0.0
        %351 = vmatprep.subr.mxu0 0.0
        %352 = vmatpush1.msra.mxu0 0.0
        %353 = vmatprep.subr.mxu0 0.0
        %354 = vmatpush1.msra.mxu0 0.0
        %355 = vmatprep.subr.mxu0 0.0
        %356 = vmatpush1.msra.mxu0 0.0
        %357 = vmatprep.subr.mxu0 0.0
        %358 = vmatpush1.msra.mxu0 0.0
        %359 = vmatprep.subr.mxu0 0.0
        %360 = vmatpush1.msra.mxu0 0.0
        %361 = vmatprep.subr.mxu0 0.0
        %362 = vmatpush1.msra.mxu0 0.0
        %363 = vmatprep.subr.mxu0 0.0
        %364 = vmatpush1.msra.mxu0 0.0
        %365 = vmatprep.subr.mxu0 0.0
        %366 = vmatpush1.msra.mxu0 0.0
        %367 = vmatprep.subr.mxu0 0.0
        %368 = vmatpush1.msra.mxu0 0.0
        %369 = vmatprep.subr.mxu0 0.0
        %370 = vmatpush1.msra.mxu0 0.0
        %371 = vmatprep.subr.mxu0 0.0
        %372 = vmatpush1.msra.mxu0 0.0
        %373 = vmatprep.subr.mxu0 0.0
        %374 = vmatpush1.msra.mxu0 0.0
        %375 = vmatprep.subr.mxu0 0.0
        %376 = vmatpush1.msra.mxu0 0.0
        %377 = vmatprep.subr.mxu0 0.0
        %378 = vmatpush1.msra.mxu0 0.0
        %379 = vmatprep.subr.mxu0 0.0
        %380 = vmatpush1.msra.mxu0 0.0
        %381 = vmatprep.subr.mxu0 0.0
        %382 = vmatpush1.msra.mxu0 0.0
        %383 = vmatprep.subr.mxu0 0.0
        %384 = vmatpush1.msra.mxu0 0.0
        %385 = vmatprep.subr.mxu0 0.0
        %386 = vmatpush1.msra.mxu0 0.0
        %387 = vmatprep.subr.mxu0 0.0
        %388 = vmatpush1.msra.mxu0 0.0
        %389 = vmatprep.subr.mxu0 0.0
        %390 = vmatpush1.msra.mxu0 0.0
        %391 = vmatprep.subr.mxu0 0.0
        %392 = vmatpush1.msra.mxu0 0.0
        %393 = vmatprep.subr.mxu0 0.0
        %394 = vmatpush1.msra.mxu0 0.0
        %395 = vmatprep.mubr.f32.mxu0 0.0
        %v396 = vand.u32 %v242, 4294901760
        %397 = vmatmul.mubr.f32.gmra.mrb[0].mxu0 %v396
        %v398 = vpop.f32.mrb[0].mxu0
        %v399 = vadd.f32 %v318, %v398
        %v400 = vpop.f32.mrb[0].mxu0
        %401 = vdwg.mxu0
        %402 = vmatprep.subr.mxu0 0.0
        %v403 = vand.u32 %v238, 4294901760
        %v404 = vsub.f32 %v238, %v403
        %405 = vmatpush1.msra.mxu0 %v404
        %406 = vmatprep.subr.mxu0 0.0
        %v407 = vand.u32 %v239, 4294901760
        %v408 = vsub.f32 %v239, %v407
        %409 = vmatpush1.msra.mxu0 %v408
        %410 = vmatprep.subr.mxu0 0.0
        %411 = vmatpush1.msra.mxu0 0.0
        %412 = vmatprep.subr.mxu0 0.0
        %413 = vmatpush1.msra.mxu0 0.0
        %414 = vmatprep.subr.mxu0 0.0
        %415 = vmatpush1.msra.mxu0 0.0
        %416 = vmatprep.subr.mxu0 0.0
        %417 = vmatpush1.msra.mxu0 0.0
        %418 = vmatprep.subr.mxu0 0.0
        %419 = vmatpush1.msra.mxu0 0.0
        %420 = vmatprep.subr.mxu0 0.0
        %421 = vmatpush1.msra.mxu0 0.0
        %422 = vmatprep.subr.mxu0 0.0
        %423 = vmatpush1.msra.mxu0 0.0
        %424 = vmatprep.subr.mxu0 0.0
        %425 = vmatpush1.msra.mxu0 0.0
        %426 = vmatprep.subr.mxu0 0.0
        %427 = vmatpush1.msra.mxu0 0.0
        %428 = vmatprep.subr.mxu0 0.0
        %429 = vmatpush1.msra.mxu0 0.0
        %430 = vmatprep.subr.mxu0 0.0
        %431 = vmatpush1.msra.mxu0 0.0
        %432 = vmatprep.subr.mxu0 0.0
        %433 = vmatpush1.msra.mxu0 0.0
        %434 = vmatprep.subr.mxu0 0.0
        %435 = vmatpush1.msra.mxu0 0.0
        %436 = vmatprep.subr.mxu0 0.0
        %437 = vmatpush1.msra.mxu0 0.0
        %438 = vmatprep.subr.mxu0 0.0
        %439 = vmatpush1.msra.mxu0 0.0
        %440 = vmatprep.subr.mxu0 0.0
        %441 = vmatpush1.msra.mxu0 0.0
        %442 = vmatprep.subr.mxu0 0.0
        %443 = vmatpush1.msra.mxu0 0.0
        %444 = vmatprep.subr.mxu0 0.0
        %445 = vmatpush1.msra.mxu0 0.0
        %446 = vmatprep.subr.mxu0 0.0
        %447 = vmatpush1.msra.mxu0 0.0
        %448 = vmatprep.subr.mxu0 0.0
        %449 = vmatpush1.msra.mxu0 0.0
        %450 = vmatprep.subr.mxu0 0.0
        %451 = vmatpush1.msra.mxu0 0.0
        %452 = vmatprep.subr.mxu0 0.0
        %453 = vmatpush1.msra.mxu0 0.0
        %454 = vmatprep.subr.mxu0 0.0
        %455 = vmatpush1.msra.mxu0 0.0
        %456 = vmatprep.subr.mxu0 0.0
        %457 = vmatpush1.msra.mxu0 0.0
        %458 = vmatprep.subr.mxu0 0.0
        %459 = vmatpush1.msra.mxu0 0.0
        %460 = vmatprep.subr.mxu0 0.0
        %461 = vmatpush1.msra.mxu0 0.0
        %462 = vmatprep.subr.mxu0 0.0
        %463 = vmatpush1.msra.mxu0 0.0
        %464 = vmatprep.subr.mxu0 0.0
        %465 = vmatpush1.msra.mxu0 0.0
        %466 = vmatprep.subr.mxu0 0.0
        %467 = vmatpush1.msra.mxu0 0.0
        %468 = vmatprep.subr.mxu0 0.0
        %469 = vmatpush1.msra.mxu0 0.0
        %470 = vmatprep.mubr.f32.mxu0 0.0
        %v471 = vand.u32 %v242, 4294901760
        %v472 = vsub.f32 %v242, %v471
        %473 = vmatmul.mubr.f32.gmra.mrb[0].mxu0 %v472
        %v474 = vpop.f32.mrb[0].mxu0
        %v475 = vadd.f32 %v399, %v474
        %v476 = vpop.f32.mrb[0].mxu0
        %477 = vdwg.mxu0
        %478 = vmatprep.subr.mxu0 0.0
        %v479 = vand.u32 %v238, 4294901760
        %480 = vmatpush1.msra.mxu0 %v479
        %481 = vmatprep.subr.mxu0 0.0
        %v482 = vand.u32 %v239, 4294901760
        %483 = vmatpush1.msra.mxu0 %v482
        %484 = vmatprep.subr.mxu0 0.0
        %485 = vmatpush1.msra.mxu0 0.0
        %486 = vmatprep.subr.mxu0 0.0
        %487 = vmatpush1.msra.mxu0 0.0
        %488 = vmatprep.subr.mxu0 0.0
        %489 = vmatpush1.msra.mxu0 0.0
        %490 = vmatprep.subr.mxu0 0.0
        %491 = vmatpush1.msra.mxu0 0.0
        %492 = vmatprep.subr.mxu0 0.0
        %493 = vmatpush1.msra.mxu0 0.0
        %494 = vmatprep.subr.mxu0 0.0
        %495 = vmatpush1.msra.mxu0 0.0
        %496 = vmatprep.subr.mxu0 0.0
        %497 = vmatpush1.msra.mxu0 0.0
        %498 = vmatprep.subr.mxu0 0.0
        %499 = vmatpush1.msra.mxu0 0.0
        %500 = vmatprep.subr.mxu0 0.0
        %501 = vmatpush1.msra.mxu0 0.0
        %502 = vmatprep.subr.mxu0 0.0
        %503 = vmatpush1.msra.mxu0 0.0
        %504 = vmatprep.subr.mxu0 0.0
        %505 = vmatpush1.msra.mxu0 0.0
        %506 = vmatprep.subr.mxu0 0.0
        %507 = vmatpush1.msra.mxu0 0.0
        %508 = vmatprep.subr.mxu0 0.0
        %509 = vmatpush1.msra.mxu0 0.0
        %510 = vmatprep.subr.mxu0 0.0
        %511 = vmatpush1.msra.mxu0 0.0
        %512 = vmatprep.subr.mxu0 0.0
        %513 = vmatpush1.msra.mxu0 0.0
        %514 = vmatprep.subr.mxu0 0.0
        %515 = vmatpush1.msra.mxu0 0.0
        %516 = vmatprep.subr.mxu0 0.0
        %517 = vmatpush1.msra.mxu0 0.0
        %518 = vmatprep.subr.mxu0 0.0
        %519 = vmatpush1.msra.mxu0 0.0
        %520 = vmatprep.subr.mxu0 0.0
        %521 = vmatpush1.msra.mxu0 0.0
        %522 = vmatprep.subr.mxu0 0.0
        %523 = vmatpush1.msra.mxu0 0.0
        %524 = vmatprep.subr.mxu0 0.0
        %525 = vmatpush1.msra.mxu0 0.0
        %526 = vmatprep.subr.mxu0 0.0
        %527 = vmatpush1.msra.mxu0 0.0
        %528 = vmatprep.subr.mxu0 0.0
        %529 = vmatpush1.msra.mxu0 0.0
        %530 = vmatprep.subr.mxu0 0.0
        %531 = vmatpush1.msra.mxu0 0.0
        %532 = vmatprep.subr.mxu0 0.0
        %533 = vmatpush1.msra.mxu0 0.0
        %534 = vmatprep.subr.mxu0 0.0
        %535 = vmatpush1.msra.mxu0 0.0
        %536 = vmatprep.subr.mxu0 0.0
        %537 = vmatpush1.msra.mxu0 0.0
        %538 = vmatprep.subr.mxu0 0.0
        %539 = vmatpush1.msra.mxu0 0.0
        %540 = vmatprep.subr.mxu0 0.0
        %541 = vmatpush1.msra.mxu0 0.0
        %542 = vmatprep.subr.mxu0 0.0
        %543 = vmatpush1.msra.mxu0 0.0
        %544 = vmatprep.mubr.f32.mxu0 0.0
        %v545 = vand.u32 %v242, 4294901760
        %v546 = vsub.f32 %v242, %v545
        %v547 = vand.u32 %v546, 4294901760
        %548 = vmatmul.mubr.f32.gmra.mrb[0].mxu0 %v547
        %v549 = vpop.f32.mrb[0].mxu0
        %v550 = vadd.f32 %v475, %v549
        %v551 = vpop.f32.mrb[0].mxu0
        %552 = vdwg.mxu0
        %553 = vmatprep.subr.mxu0 0.0
        %v554 = vand.u32 %v238, 4294901760
        %v555 = vsub.f32 %v238, %v554
        %v556 = vand.u32 %v555, 4294901760
        %557 = vmatpush1.msra.mxu0 %v556
        %558 = vmatprep.subr.mxu0 0.0
        %v559 = vand.u32 %v239, 4294901760
        %v560 = vsub.f32 %v239, %v559
        %v561 = vand.u32 %v560, 4294901760
        %562 = vmatpush1.msra.mxu0 %v561
        %563 = vmatprep.subr.mxu0 0.0
        %564 = vmatpush1.msra.mxu0 0.0
        %565 = vmatprep.subr.mxu0 0.0
        %566 = vmatpush1.msra.mxu0 0.0
        %567 = vmatprep.subr.mxu0 0.0
        %568 = vmatpush1.msra.mxu0 0.0
        %569 = vmatprep.subr.mxu0 0.0
        %570 = vmatpush1.msra.mxu0 0.0
        %571 = vmatprep.subr.mxu0 0.0
        %572 = vmatpush1.msra.mxu0 0.0
        %573 = vmatprep.subr.mxu0 0.0
        %574 = vmatpush1.msra.mxu0 0.0
        %575 = vmatprep.subr.mxu0 0.0
        %576 = vmatpush1.msra.mxu0 0.0
        %577 = vmatprep.subr.mxu0 0.0
        %578 = vmatpush1.msra.mxu0 0.0
        %579 = vmatprep.subr.mxu0 0.0
        %580 = vmatpush1.msra.mxu0 0.0
        %581 = vmatprep.subr.mxu0 0.0
        %582 = vmatpush1.msra.mxu0 0.0
        %583 = vmatprep.subr.mxu0 0.0
        %584 = vmatpush1.msra.mxu0 0.0
        %585 = vmatprep.subr.mxu0 0.0
        %586 = vmatpush1.msra.mxu0 0.0
        %587 = vmatprep.subr.mxu0 0.0
        %588 = vmatpush1.msra.mxu0 0.0
        %589 = vmatprep.subr.mxu0 0.0
        %590 = vmatpush1.msra.mxu0 0.0
        %591 = vmatprep.subr.mxu0 0.0
        %592 = vmatpush1.msra.mxu0 0.0
        %593 = vmatprep.subr.mxu0 0.0
        %594 = vmatpush1.msra.mxu0 0.0
        %595 = vmatprep.subr.mxu0 0.0
        %596 = vmatpush1.msra.mxu0 0.0
        %597 = vmatprep.subr.mxu0 0.0
        %598 = vmatpush1.msra.mxu0 0.0
        %599 = vmatprep.subr.mxu0 0.0
        %600 = vmatpush1.msra.mxu0 0.0
        %601 = vmatprep.subr.mxu0 0.0
        %602 = vmatpush1.msra.mxu0 0.0
        %603 = vmatprep.subr.mxu0 0.0
        %604 = vmatpush1.msra.mxu0 0.0
        %605 = vmatprep.subr.mxu0 0.0
        %606 = vmatpush1.msra.mxu0 0.0
        %607 = vmatprep.subr.mxu0 0.0
        %608 = vmatpush1.msra.mxu0 0.0
        %609 = vmatprep.subr.mxu0 0.0
        %610 = vmatpush1.msra.mxu0 0.0
        %611 = vmatprep.subr.mxu0 0.0
        %612 = vmatpush1.msra.mxu0 0.0
        %613 = vmatprep.subr.mxu0 0.0
        %614 = vmatpush1.msra.mxu0 0.0
        %615 = vmatprep.subr.mxu0 0.0
        %616 = vmatpush1.msra.mxu0 0.0
        %617 = vmatprep.subr.mxu0 0.0
        %618 = vmatpush1.msra.mxu0 0.0
        %619 = vmatprep.subr.mxu0 0.0
        %620 = vmatpush1.msra.mxu0 0.0
        %621 = vmatprep.subr.mxu0 0.0
        %622 = vmatpush1.msra.mxu0 0.0
        %623 = vmatprep.mubr.f32.mxu0 0.0
        %v624 = vand.u32 %v242, 4294901760
        %625 = vmatmul.mubr.f32.gmra.mrb[0].mxu0 %v624
        %v626 = vpop.f32.mrb[0].mxu0
        %v627 = vadd.f32 %v550, %v626
        %v628 = vpop.f32.mrb[0].mxu0
        %629 = vdwg.mxu0
        %630 = vmatprep.subr.mxu0 0.0
        %v631 = vand.u32 %v238, 4294901760
        %632 = vmatpush1.msra.mxu0 %v631
        %633 = vmatprep.subr.mxu0 0.0
        %v634 = vand.u32 %v239, 4294901760
        %635 = vmatpush1.msra.mxu0 %v634
        %636 = vmatprep.subr.mxu0 0.0
        %637 = vmatpush1.msra.mxu0 0.0
        %638 = vmatprep.subr.mxu0 0.0
        %639 = vmatpush1.msra.mxu0 0.0
        %640 = vmatprep.subr.mxu0 0.0
        %641 = vmatpush1.msra.mxu0 0.0
        %642 = vmatprep.subr.mxu0 0.0
        %643 = vmatpush1.msra.mxu0 0.0
        %644 = vmatprep.subr.mxu0 0.0
        %645 = vmatpush1.msra.mxu0 0.0
        %646 = vmatprep.subr.mxu0 0.0
        %647 = vmatpush1.msra.mxu0 0.0
        %648 = vmatprep.subr.mxu0 0.0
        %649 = vmatpush1.msra.mxu0 0.0
        %650 = vmatprep.subr.mxu0 0.0
        %651 = vmatpush1.msra.mxu0 0.0
        %652 = vmatprep.subr.mxu0 0.0
        %653 = vmatpush1.msra.mxu0 0.0
        %654 = vmatprep.subr.mxu0 0.0
        %655 = vmatpush1.msra.mxu0 0.0
        %656 = vmatprep.subr.mxu0 0.0
        %657 = vmatpush1.msra.mxu0 0.0
        %658 = vmatprep.subr.mxu0 0.0
        %659 = vmatpush1.msra.mxu0 0.0
        %660 = vmatprep.subr.mxu0 0.0
        %661 = vmatpush1.msra.mxu0 0.0
        %662 = vmatprep.subr.mxu0 0.0
        %663 = vmatpush1.msra.mxu0 0.0
        %664 = vmatprep.subr.mxu0 0.0
        %665 = vmatpush1.msra.mxu0 0.0
        %666 = vmatprep.subr.mxu0 0.0
        %667 = vmatpush1.msra.mxu0 0.0
        %668 = vmatprep.subr.mxu0 0.0
        %669 = vmatpush1.msra.mxu0 0.0
        %670 = vmatprep.subr.mxu0 0.0
        %671 = vmatpush1.msra.mxu0 0.0
        %672 = vmatprep.subr.mxu0 0.0
        %673 = vmatpush1.msra.mxu0 0.0
        %674 = vmatprep.subr.mxu0 0.0
        %675 = vmatpush1.msra.mxu0 0.0
        %676 = vmatprep.subr.mxu0 0.0
        %677 = vmatpush1.msra.mxu0 0.0
        %678 = vmatprep.subr.mxu0 0.0
        %679 = vmatpush1.msra.mxu0 0.0
        %680 = vmatprep.subr.mxu0 0.0
        %681 = vmatpush1.msra.mxu0 0.0
        %682 = vmatprep.subr.mxu0 0.0
        %683 = vmatpush1.msra.mxu0 0.0
        %684 = vmatprep.subr.mxu0 0.0
        %685 = vmatpush1.msra.mxu0 0.0
        %686 = vmatprep.subr.mxu0 0.0
        %687 = vmatpush1.msra.mxu0 0.0
        %688 = vmatprep.subr.mxu0 0.0
        %689 = vmatpush1.msra.mxu0 0.0
        %690 = vmatprep.subr.mxu0 0.0
        %691 = vmatpush1.msra.mxu0 0.0
        %692 = vmatprep.subr.mxu0 0.0
        %693 = vmatpush1.msra.mxu0 0.0
        %694 = vmatprep.subr.mxu0 0.0
        %695 = vmatpush1.msra.mxu0 0.0
        %696 = vmatprep.mubr.f32.mxu0 0.0
        %v697 = vand.u32 %v242, 4294901760
        %698 = vmatmul.mubr.f32.gmra.mrb[0].mxu0 %v697
        %v699 = vpop.f32.mrb[0].mxu0
        %v700 = vadd.f32 %v627, %v699
        %v701 = vpop.f32.mrb[0].mxu0
        %702 = vdwg.mxu0
        %v703 = vmul.f32 %v700, %v237
        %v704 = vsel %vm240, %v703, 0.0
        %705 = vadd.xlane.f32.xlu0 %v704
        %v706 = vpop.xlane.xlu0 %705
        %v707 = vld [vmem:[#allocation2] sm:$0x1]
        %v708 = vsub.f32 1.0, %v706
        %v709 = vmul.f32 %v223, %v708
        %vm710 = vcmask 7168
        %v711 = vsel %vm710, %v709, 0.0
        %712 = vadd.xlane.f32.xlu0 %v711
        %v713 = vpop.xlane.xlu0 %712
        %v714 = vrot.slane %v713, 4
        %v715 = vadd.f32 %v713, %v714
        %v716 = vrot.slane %v715, 2
        %v717 = vadd.f32 %v715, %v716
        %v718 = vrot.slane %v717, 1
        %v719 = vadd.f32 %v717, %v718
        %s720 = vtos %v719
        %v721 = vstv %s720
        %v722 = vadd.f32 %v707, %v721
        %vm723 = vcmask 0
        %724 = vst.msk [vmem:[#allocation2] sm:$0x1] %vm723, %v722
        %p725 = scmp.eq.s32.totalorder %s16, 2
        // Predicated region
        $region41: #{hierarchy_loss.1} parent=35 // pred_check
          %p726 = pneg %p725
        $region42: #{hierarchy_loss.1} parent=35 // pred_check_branch
          %728 = sbr.rel (%p726) target = $region44
        $region43: #{hierarchy_loss.1} parent=35 // pred_region
          %v729 = vld [vmem:[#allocation2] sm:$0x1]
          %730 = vst.msk [vmem:[#allocation3] sm:$0x1] %vm723, %v729
        $region44: #{hierarchy_loss.1} parent=35 // pred_fallthru
          _
        // Predicated region
        $region45: #{hierarchy_loss.1} parent=35 // pred_check
          %p731 = pneg %p128
        $region46: #{hierarchy_loss.1} parent=35 // pred_check_branch
          %733 = sbr.rel (%p731) target = $region48
        $region47: #{hierarchy_loss.1} parent=35 // pred_region
          %s735 = ssub.s32 16, 16
          %736 = vsyncadd [#allocation4], %s735
          %s738 = sshll.u32 [#allocation3], 4
          %s739 = int_to_ptr.vmem [resolvable:$true] %s738
          %741 = dma.vmem_to_hbm [thread:$0]  %s739, 16, %s4, [#allocation4]
        $region48: #{hierarchy_loss.1} parent=35 // pred_fallthru
          _
        // Predicated region
        $region49: #{hierarchy_loss.1} parent=35 // pred_check
          %p742 = pneg %p128
        $region50: #{hierarchy_loss.1} parent=35 // pred_check_branch
          %744 = sbr.rel (%p742) target = $region52
        $region51: #{hierarchy_loss.1} parent=35 // pred_region
          %745 = dma.done [#allocation4], 16
        $region52: #{hierarchy_loss.1} parent=35 // pred_fallthru
          _
      $region36: #{hierarchy_loss.1} parent=5 // pred_fallthru
        _
      %p746 = scmp.le.s32.totalorder 2, %s11
      // Predicated region
      $region53: #{hierarchy_loss.1} parent=5 // pred_check
        %p747 = pneg %p746
      $region54: #{hierarchy_loss.1} parent=5 // pred_check_branch
        %749 = sbr.rel (%p747) target = $region56
      $region55: #{hierarchy_loss.1} parent=5 // pred_region
        %s750 = ssub.s32 %s11, 2
      $region56: #{hierarchy_loss.1} parent=5 // pred_fallthru
        _
    $region6: #{hierarchy_loss.1} parent=1 // loop_footer
      %s15 = sadd.s32 1, %s11
    $region7: #{hierarchy_loss.1} parent=1 // loop_footer_branch
      %10 = sbr.rel target = $region3
    $region8: #{hierarchy_loss.1} parent=1 // loop_exit
      _
    %751 = vsyncpa [#allocation4], 1
    %s752 = scalar_lea.sflag [#allocation4], 1
    %753 = vsyncpa %s752, 1

</llo_original>
